<compile_context>
chip_gen: v5e
topology: v5e:2x2
jax: 0.10.0
libtpu: 0.0.40
codegen_flags: <defaults>
</compile_context>

<pallas_src>
import functools

import jax
import jax.numpy as jnp
from jax.experimental import pallas as pl
from jax.experimental.pallas import tpu as pltpu

dim_z = 10


def _round_up(x, m):
    return (x + m - 1) // m * m


def dec_kernel(z_ref, w1_ref, b1_ref, w2_ref, b2_ref, w3_ref, b3_ref, out_ref,
               *, tb, z_whole):
    if z_whole:
        # z is one VMEM-resident block; pick this grid step's rows.
        row = pl.multiple_of(pl.program_id(0) * tb, 8)
        zt = z_ref[pl.ds(row, tb), :]
    else:
        zt = z_ref[...]
    # fc1 + relu   (bf16 MXU operands, f32 accumulation, f32 bias)
    h1 = jnp.dot(zt, w1_ref[...], preferred_element_type=jnp.float32)
    h1 = jnp.maximum(h1 + b1_ref[...], 0.0)
    # fc2 + relu
    h2 = jnp.dot(h1.astype(jnp.bfloat16), w2_ref[...],
                 preferred_element_type=jnp.float32)
    h2 = jnp.maximum(h2 + b2_ref[...], 0.0)
    # fc3 + sigmoid; store bf16 to halve the dominant output HBM writeback.
    h3 = jnp.dot(h2.astype(jnp.bfloat16), w3_ref[...],
                 preferred_element_type=jnp.float32)
    out_ref[...] = jax.nn.sigmoid(h3 + b3_ref[...]).astype(out_ref.dtype)


def dec_forward(z, params, *, tb=2048):
    """z: any shape whose size is a multiple of dim_z (like torch view(-1, dim_z))."""
    w1, b1, w2, b2, w3, b3 = params
    z2d = z.reshape(-1, dim_z)
    B = z2d.shape[0]
    dim2 = w1.shape[1]
    dim1 = w2.shape[1]
    dim_in = w3.shape[1]   # 784; kept as-is (no lane padding of the output)

    # bf16 matmul operands; biases / accumulation stay f32.
    z2d = z2d.astype(jnp.bfloat16)
    w1 = w1.astype(jnp.bfloat16)
    w2 = w2.astype(jnp.bfloat16)
    w3 = w3.astype(jnp.bfloat16)
    b1 = b1.astype(jnp.float32)
    b2 = b2.astype(jnp.float32)
    b3 = b3.astype(jnp.float32)

    # Batch tile: multiple of 8 sublanes, at most the (8-padded) batch.
    # No forced multi-step grid: single-TC chips get one big tile; v7x's two
    # TensorCores only share work when B > tb (enough rows per core).
    tb_eff = max(8, min(tb, _round_up(B, 8)))
    Bp = _round_up(B, tb_eff)
    if Bp != B:
        z2d = jnp.pad(z2d, ((0, Bp - B), (0, 0)))  # tail rows: garbage, row-sliced off
    grid = (Bp // tb_eff,)

    # z: single untiled block (one contiguous DMA, stays VMEM-resident) when
    # small; avoids skinny per-step (tb, 10) transfers. Fallback for huge B.
    z_whole = Bp * 128 * 2 <= 4 * 1024 * 1024   # lane-padded bf16 footprint cap
    if z_whole:
        z_spec = pl.BlockSpec((Bp, dim_z), lambda i: (0, 0))
    else:
        z_spec = pl.BlockSpec((tb_eff, dim_z), lambda i: (i, 0))

    # Weights/biases: constant block index -> fetched once, stay VMEM-resident.
    full = lambda shape: pl.BlockSpec(shape, lambda i: (0, 0))

    flops = 2 * Bp * (dim_z * dim2 + dim2 * dim1 + dim1 * dim_in)
    bytes_accessed = (
        Bp * dim_z * 2                                        # z (bf16)
        + (dim_z * dim2 + dim2 * dim1 + dim1 * dim_in) * 2    # weights (bf16)
        + (dim2 + dim1 + dim_in) * 4                          # biases (f32)
        + Bp * dim_in * 2                                     # output (bf16), dominant
    )

    kernel = functools.partial(dec_kernel, tb=tb_eff, z_whole=z_whole)

    out = pl.pallas_call(
        kernel,
        out_shape=jax.ShapeDtypeStruct((Bp, dim_in), jnp.bfloat16),
        grid=grid,
        in_specs=[
            z_spec,
            full((dim_z, dim2)), full((1, dim2)),       # fc1
            full((dim2, dim1)), full((1, dim1)),        # fc2
            full((dim1, dim_in)), full((1, dim_in)),    # fc3 (784 cols, unpadded)
        ],
        out_specs=pl.BlockSpec((tb_eff, dim_in), lambda i: (i, 0)),
        compiler_params=pltpu.CompilerParams(
            dimension_semantics=("parallel",),
            # 48 MiB: safe on v7x's 64 MiB physical VMEM, above v5e's 16 MiB
            # scoped default; tb=2048 bf16 tiles + temporaries fit easily.
            vmem_limit_bytes=48 * 1024 * 1024,
        ),
        cost_estimate=pl.CostEstimate(
            flops=flops,
            transcendentals=Bp * dim_in,
            bytes_accessed=bytes_accessed,
        ),
    )(z2d, w1, b1, w2, b2, w3, b3)

    if Bp != B:
        out = out[:B]   # row slice only (tiny); no column slicing needed
    # torch: x.view(-1, 1, 28, 28)
    return out.reshape(-1, 1, 28, 28)


def dec_reference(z, params):
    """Pure-JAX f32 reference for correctness checking."""
    w1, b1, w2, b2, w3, b3 = params
    z2d = z.reshape(-1, dim_z).astype(jnp.float32)
    h1 = jnp.maximum(z2d @ w1 + b1, 0.0)
    h2 = jnp.maximum(h1 @ w2 + b2, 0.0)
    x = jax.nn.sigmoid(h2 @ w3 + b3)
    return x.reshape(-1, 1, 28, 28)


def init_params(key, dim_in, dim1, dim2, dim_z):
    """Deterministic synthetic init (PyTorch Linear stores (out,in); we keep (in,out))."""
    ks = jax.random.split(key, 6)
    def lin(kw, kb, fan_in, fan_out):
        bound = 1.0 / jnp.sqrt(fan_in)
        w = jax.random.uniform(kw, (fan_in, fan_out), jnp.float32, -bound, bound)
        b = jax.random.uniform(kb, (1, fan_out), jnp.float32, -bound, bound)
        return w, b
    w1, b1 = lin(ks[0], ks[1], dim_z, dim2)
    w2, b2 = lin(ks[2], ks[3], dim2, dim1)
    w3, b3 = lin(ks[4], ks[5], dim1, dim_in)
    return (w1, b1, w2, b2, w3, b3)


if __name__ == "__main__":
    key = jax.random.PRNGKey(0)
    kp, kz1, kz2 = jax.random.split(key, 3)

    dim_in, dim1, dim2 = 784, 128, 64   # dim_in=784 so the (-1,1,28,28) view is valid
    params = init_params(kp, dim_in, dim1, dim2, dim_z)

    # small batch: z of shape (2, 4, dim_z) -> view(-1, dim_z) = (8, dim_z)
    z = jax.random.normal(kz1, (2, 4, dim_z), jnp.float32)
    out = dec_forward(z, params)
    jax.block_until_ready(out)
    assert out.shape == (8, 1, 28, 28), out.shape
    ref = dec_reference(z, params)
    assert float(jnp.max(jnp.abs(out.astype(jnp.float32) - ref))) < 3e-2

    # batch that is not a multiple of 8 (exercises tail-row padding + row slice)
    z2 = jax.random.normal(kz2, (50, dim_z), jnp.float32)
    out2 = dec_forward(z2, params)
    jax.block_until_ready(out2)
    assert out2.shape == (50, 1, 28, 28), out2.shape
    ref2 = dec_reference(z2, params)
    assert float(jnp.max(jnp.abs(out2.astype(jnp.float32) - ref2))) < 3e-2

    print("KERNEL_OK")
</pallas_src>

<mosaic_0001>
module attributes {stable_mosaic.version = 11 : i64} {
  func.func @dec_kernel(%arg0: i32, %arg1: memref<8x10xbf16, #tpu.memory_space<vmem>>, %arg2: memref<10x64xbf16, #tpu.memory_space<vmem>>, %arg3: memref<1x64xf32, #tpu.memory_space<vmem>>, %arg4: memref<64x128xbf16, #tpu.memory_space<vmem>>, %arg5: memref<1x128xf32, #tpu.memory_space<vmem>>, %arg6: memref<128x784xbf16, #tpu.memory_space<vmem>>, %arg7: memref<1x784xf32, #tpu.memory_space<vmem>>, %arg8: memref<8x784xbf16, #tpu.memory_space<vmem>>) attributes {dimension_semantics = [#tpu.dimension_semantics<parallel>], iteration_bounds = array<i64: 1>, scalar_prefetch = 0 : i64, scratch_operands = 0 : i64, tpu.core_type = #tpu.core_type<tc>, window_params = [{pipeline_mode = #tpu.pipeline_mode<synchronous>, transform_indices = @transform_0, window_bounds = array<i64: 8, 10>}, {pipeline_mode = #tpu.pipeline_mode<synchronous>, transform_indices = @transform_1, window_bounds = array<i64: 10, 64>}, {pipeline_mode = #tpu.pipeline_mode<synchronous>, transform_indices = @transform_2, window_bounds = array<i64: 1, 64>}, {pipeline_mode = #tpu.pipeline_mode<synchronous>, transform_indices = @transform_3, window_bounds = array<i64: 64, 128>}, {pipeline_mode = #tpu.pipeline_mode<synchronous>, transform_indices = @transform_4, window_bounds = array<i64: 1, 128>}, {pipeline_mode = #tpu.pipeline_mode<synchronous>, transform_indices = @transform_5, window_bounds = array<i64: 128, 784>}, {pipeline_mode = #tpu.pipeline_mode<synchronous>, transform_indices = @transform_6, window_bounds = array<i64: 1, 784>}, {transform_indices = @transform_7, window_bounds = array<i64: 8, 784>}]} {
    %c8_i32 = arith.constant 8 : i32
    %0 = arith.muli %arg0, %c8_i32 : i32
    %1 = tpu.assume_multiple %0, 8 : i32
    %2 = arith.index_cast %1 : i32 to index
    %c0 = arith.constant 0 : index
    %3 = vector.load %arg1[%2, %c0] : memref<8x10xbf16, #tpu.memory_space<vmem>>, vector<8x10xbf16>
    %c0_0 = arith.constant 0 : index
    %c0_1 = arith.constant 0 : index
    %4 = vector.load %arg2[%c0_0, %c0_1] : memref<10x64xbf16, #tpu.memory_space<vmem>>, vector<10x64xbf16>
    %cst = arith.constant dense<0.000000e+00> : vector<8x64xf32>
    %5 = tpu.matmul %3, %4, %cst {dimension_numbers = #tpu.dot_dimension_numbers<[1], [0], [0], [1], [0, 0, 1, 1], [], []>} : vector<8x10xbf16>, vector<10x64xbf16>, vector<8x64xf32> -> vector<8x64xf32>
    %c0_2 = arith.constant 0 : index
    %c0_3 = arith.constant 0 : index
    %6 = vector.load %arg3[%c0_2, %c0_3] : memref<1x64xf32, #tpu.memory_space<vmem>>, vector<1x64xf32>
    %7 = vector.broadcast %6 : vector<1x64xf32> to vector<8x64xf32>
    %8 = arith.addf %5, %7 : vector<8x64xf32>
    %cst_4 = arith.constant 0.000000e+00 : f32
    %9 = vector.broadcast %cst_4 : f32 to vector<8x64xf32>
    %10 = arith.maximumf %8, %9 : vector<8x64xf32>
    %11 = arith.truncf %10 : vector<8x64xf32> to vector<8x64xbf16>
    %c0_5 = arith.constant 0 : index
    %c0_6 = arith.constant 0 : index
    %12 = vector.load %arg4[%c0_5, %c0_6] : memref<64x128xbf16, #tpu.memory_space<vmem>>, vector<64x128xbf16>
    %cst_7 = arith.constant dense<0.000000e+00> : vector<8x128xf32>
    %13 = tpu.matmul %11, %12, %cst_7 {dimension_numbers = #tpu.dot_dimension_numbers<[1], [0], [0], [1], [0, 0, 1, 1], [], []>} : vector<8x64xbf16>, vector<64x128xbf16>, vector<8x128xf32> -> vector<8x128xf32>
    %c0_8 = arith.constant 0 : index
    %c0_9 = arith.constant 0 : index
    %14 = vector.load %arg5[%c0_8, %c0_9] : memref<1x128xf32, #tpu.memory_space<vmem>>, vector<1x128xf32>
    %15 = vector.broadcast %14 : vector<1x128xf32> to vector<8x128xf32>
    %16 = arith.addf %13, %15 : vector<8x128xf32>
    %cst_10 = arith.constant 0.000000e+00 : f32
    %17 = vector.broadcast %cst_10 : f32 to vector<8x128xf32>
    %18 = arith.maximumf %16, %17 : vector<8x128xf32>
    %19 = arith.truncf %18 : vector<8x128xf32> to vector<8x128xbf16>
    %c0_11 = arith.constant 0 : index
    %c0_12 = arith.constant 0 : index
    %20 = vector.load %arg6[%c0_11, %c0_12] : memref<128x784xbf16, #tpu.memory_space<vmem>>, vector<128x784xbf16>
    %cst_13 = arith.constant dense<0.000000e+00> : vector<8x784xf32>
    %21 = tpu.matmul %19, %20, %cst_13 {dimension_numbers = #tpu.dot_dimension_numbers<[1], [0], [0], [1], [0, 0, 1, 1], [], []>} : vector<8x128xbf16>, vector<128x784xbf16>, vector<8x784xf32> -> vector<8x784xf32>
    %c0_14 = arith.constant 0 : index
    %c0_15 = arith.constant 0 : index
    %22 = vector.load %arg7[%c0_14, %c0_15] : memref<1x784xf32, #tpu.memory_space<vmem>>, vector<1x784xf32>
    %23 = vector.broadcast %22 : vector<1x784xf32> to vector<8x784xf32>
    %24 = arith.addf %21, %23 : vector<8x784xf32>
    %25 = arith.negf %24 : vector<8x784xf32>
    %26 = math.exp %25 : vector<8x784xf32>
    %cst_16 = arith.constant 1.000000e+00 : f32
    %27 = vector.broadcast %cst_16 : f32 to vector<8x784xf32>
    %28 = arith.addf %27, %26 : vector<8x784xf32>
    %29 = arith.divf %27, %28 : vector<8x784xf32>
    %30 = arith.truncf %29 : vector<8x784xf32> to vector<8x784xbf16>
    %c0_17 = arith.constant 0 : index
    %c0_18 = arith.constant 0 : index
    %31 = vector.load %arg8[%c0_17, %c0_18] : memref<8x784xbf16, #tpu.memory_space<vmem>>, vector<8x784xbf16>
    tpu.vector_store %arg8[%c0_17, %c0_18], %30 {strides = array<i32>} : memref<8x784xbf16, #tpu.memory_space<vmem>>, vector<8x784xbf16>,
    return
  }
  func.func @transform_0(%arg0: i32) -> (i32, i32) {
    %c0_i32 = arith.constant 0 : i32
    %c0_i32_0 = arith.constant 0 : i32
    %c0_i32_1 = arith.constant 0 : i32
    return %c0_i32, %c0_i32_0 : i32, i32
  }
  func.func @transform_1(%arg0: i32) -> (i32, i32) {
    %c0_i32 = arith.constant 0 : i32
    %c0_i32_0 = arith.constant 0 : i32
    %c0_i32_1 = arith.constant 0 : i32
    return %c0_i32, %c0_i32_0 : i32, i32
  }
  func.func @transform_2(%arg0: i32) -> (i32, i32) {
    %c0_i32 = arith.constant 0 : i32
    %c0_i32_0 = arith.constant 0 : i32
    %c0_i32_1 = arith.constant 0 : i32
    return %c0_i32, %c0_i32_0 : i32, i32
  }
  func.func @transform_3(%arg0: i32) -> (i32, i32) {
    %c0_i32 = arith.constant 0 : i32
    %c0_i32_0 = arith.constant 0 : i32
    %c0_i32_1 = arith.constant 0 : i32
    return %c0_i32, %c0_i32_0 : i32, i32
  }
  func.func @transform_4(%arg0: i32) -> (i32, i32) {
    %c0_i32 = arith.constant 0 : i32
    %c0_i32_0 = arith.constant 0 : i32
    %c0_i32_1 = arith.constant 0 : i32
    return %c0_i32, %c0_i32_0 : i32, i32
  }
  func.func @transform_5(%arg0: i32) -> (i32, i32) {
    %c0_i32 = arith.constant 0 : i32
    %c0_i32_0 = arith.constant 0 : i32
    %c0_i32_1 = arith.constant 0 : i32
    return %c0_i32, %c0_i32_0 : i32, i32
  }
  func.func @transform_6(%arg0: i32) -> (i32, i32) {
    %c0_i32 = arith.constant 0 : i32
    %c0_i32_0 = arith.constant 0 : i32
    %c0_i32_1 = arith.constant 0 : i32
    return %c0_i32, %c0_i32_0 : i32, i32
  }
  func.func @transform_7(%arg0: i32) -> (i32, i32) {
    %c0_i32 = arith.constant 0 : i32
    %c0_i32_0 = arith.constant 0 : i32
    return %arg0, %c0_i32 : i32, i32
  }
}

</mosaic_0001>

<llo_original>
// kernel: tpu_custom_call.1
$region0: #{tpu_custom_call.1}
  #allocation0 [shape = 'u32[]', space=smem, size = 0x4, offset = 0x4, fixed_abs, tag = 'smem constant byte address 0x4 - core index']
  #allocation1 [shape = 'u32[72,128]{1,0:T(1,128)}', space=vmem, size = 0x9000, scoped, tag = 'internal scratch']
  %s0 = inlined_call_operand.vmem [shape: bf16[8,10], index: 0, kind: input, shape index: {}]
  %s1 = inlined_call_operand.vmem [shape: bf16[10,64], index: 1, kind: input, shape index: {}]
  %s2 = inlined_call_operand.vmem [shape: f32[1,64], index: 2, kind: input, shape index: {}]
  %s3 = inlined_call_operand.vmem [shape: bf16[64,128], index: 3, kind: input, shape index: {}]
  %s4 = inlined_call_operand.vmem [shape: f32[1,128], index: 4, kind: input, shape index: {}]
  %s5 = inlined_call_operand.vmem [shape: bf16[128,784], index: 5, kind: input, shape index: {}]
  %s6 = inlined_call_operand.vmem [shape: f32[1,784], index: 6, kind: input, shape index: {}]
  %s7 = inlined_call_operand.hbm [shape: bf16[8,784], index: 7, kind: output, shape index: {}]
  %s8 = sld [smem:[#allocation0]]
  $region38: #{tpu_custom_call.1} parent=0
    _
  %s10 = ssub.s32 1, %s8
  %s11 = scalar_select 0, %s10, %s8
  $region1: #{tpu_custom_call.1} parent=0
    #allocation2 [shape = 'u8[14336]{0}', space=vmem, size = 0x3800, scoped, tag = 'output window, operand 0, single buffered']
    #allocation3 [shape = 's32[1]{0}', space=sflag, size = 0x4, scoped, tag = 'scoped memory for tpu_custom_call.1']
    %12 = vsyncpa [#allocation3], 0
    // Predicated region
    $region2: #{tpu_custom_call.1} parent=1 // pred_check
      _
    $region3: #{tpu_custom_call.1} parent=1 // pred_check_branch
      %14 = sbr.rel (0) target = $region5
    $region4: #{tpu_custom_call.1} parent=1 // pred_region
      _
    $region5: #{tpu_custom_call.1} parent=1 // pred_fallthru
      _
    // Predicated region
    $region6: #{tpu_custom_call.1} parent=1 // pred_check
      _
    $region7: #{tpu_custom_call.1} parent=1 // pred_check_branch
      %16 = sbr.rel (0) target = $region9
    $region8: #{tpu_custom_call.1} parent=1 // pred_region
      _
    $region9: #{tpu_custom_call.1} parent=1 // pred_fallthru
      _
    // Predicated region
    $region10: #{tpu_custom_call.1} parent=1 // pred_check
      _
    $region11: #{tpu_custom_call.1} parent=1 // pred_check_branch
      %18 = sbr.rel (0) target = $region13
    $region12: #{tpu_custom_call.1} parent=1 // pred_region
      _
    $region13: #{tpu_custom_call.1} parent=1 // pred_fallthru
      _
    // Predicated region
    $region14: #{tpu_custom_call.1} parent=1 // pred_check
      _
    $region15: #{tpu_custom_call.1} parent=1 // pred_check_branch
      %20 = sbr.rel (0) target = $region17
    $region16: #{tpu_custom_call.1} parent=1 // pred_region
      _
    $region17: #{tpu_custom_call.1} parent=1 // pred_fallthru
      _
    // Predicated region
    $region18: #{tpu_custom_call.1} parent=1 // pred_check
      _
    $region19: #{tpu_custom_call.1} parent=1 // pred_check_branch
      %22 = sbr.rel (0) target = $region21
    $region20: #{tpu_custom_call.1} parent=1 // pred_region
      _
    $region21: #{tpu_custom_call.1} parent=1 // pred_fallthru
      _
    // Predicated region
    $region22: #{tpu_custom_call.1} parent=1 // pred_check
      _
    $region23: #{tpu_custom_call.1} parent=1 // pred_check_branch
      %24 = sbr.rel (0) target = $region25
    $region24: #{tpu_custom_call.1} parent=1 // pred_region
      _
    $region25: #{tpu_custom_call.1} parent=1 // pred_fallthru
      _
    // Predicated region
    $region26: #{tpu_custom_call.1} parent=1 // pred_check
      _
    $region27: #{tpu_custom_call.1} parent=1 // pred_check_branch
      %26 = sbr.rel (0) target = $region29
    $region28: #{tpu_custom_call.1} parent=1 // pred_region
      _
    $region29: #{tpu_custom_call.1} parent=1 // pred_fallthru
      _
    %s28 = smul.u32 0, 8
    %s29 = sshra.s32 %s28, 3
    %s30 = sand.u32 %s28, 7
    %s31 = smul.addr %s29, 4
    %s32 = scalar_lea.vmem %s0, %s31
    %v33 = vld [vmem:[%s32] sm:$0xf]
    %v34 = vld [vmem:[%s1] sm:$0xf]
    %v35 = vld [vmem:[%s1 + $0x4] sm:$0x1]
    %v36 = vld [vmem:[%s2] sm:$0x1]
    %v38 = vperm.slane %v36, 0
    %v42 = vunpack.c.l.b16 %v34
    %v43 = vunpack.c.l.b16 %v35
    %v44 = vpack.c.b16 %v43, %v42
    %vm45 = vcmask 80896
    %v47 = vsel %vm45, %v33, 0
    %vm49 = vcmask 1044480
    %v51 = vsel %vm49, %v44, 0
    %53 = vmatpush.bf16.msra.mxu0 0
    %54 = vmatpush.bf16.msra.mxu0 0
    %55 = vmatpush.bf16.msra.mxu0 0
    %56 = vmatpush.bf16.msra.mxu0 0
    %57 = vmatpush.bf16.msra.mxu0 0
    %58 = vmatpush.bf16.msra.mxu0 0
    %59 = vmatpush.bf16.msra.mxu0 0
    %60 = vmatpush.bf16.msra.mxu0 %v51
    %61 = vmatmul.bf16.gmra.mxu0 %v47
    %v62 = vpop.f32.mrf.mxu0
    %v63 = vadd.f32 %v38, %v62
    %v64 = vpop.f32.mrf.mxu0
    %65 = vdwg.mxu0
    %v66 = vmax.f32 %v63, 0.0
    %v67 = vpack.c.bf16 %v66, %v66
    %v68 = vld [vmem:[%s3] sm:$0xf]
    %v69 = vld [vmem:[%s3 + $0x4] sm:$0xf]
    %v70 = vld [vmem:[%s3 + $0x8] sm:$0xf]
    %v71 = vld [vmem:[%s3 + $0xc] sm:$0xf]
    %v72 = vld [vmem:[%s3 + $0x10] sm:$0xf]
    %v73 = vld [vmem:[%s3 + $0x14] sm:$0xf]
    %v74 = vld [vmem:[%s3 + $0x18] sm:$0xf]
    %v75 = vld [vmem:[%s3 + $0x1c] sm:$0xf]
    %v76 = vld [vmem:[%s4] sm:$0x1]
    %v78 = vperm.slane %v76, 0
    %v88 = vunpack.c.l.b16 %v68
    %v89 = vunpack.c.l.b16 %v69
    %v90 = vunpack.c.l.b16 %v70
    %v91 = vunpack.c.l.b16 %v71
    %v92 = vunpack.c.l.b16 %v72
    %v93 = vunpack.c.l.b16 %v73
    %v94 = vunpack.c.l.b16 %v74
    %v95 = vunpack.c.l.b16 %v75
    %v96 = vpack.c.b16 %v89, %v88
    %v97 = vpack.c.b16 %v91, %v90
    %v98 = vpack.c.b16 %v93, %v92
    %v99 = vpack.c.b16 %v95, %v94
    %vm104 = vcmask 523264
    %v106 = vsel %vm104, %v67, 0
    %108 = vmatpush.bf16.msra.mxu0 0
    %109 = vmatpush.bf16.msra.mxu0 0
    %110 = vmatpush.bf16.msra.mxu0 0
    %111 = vmatpush.bf16.msra.mxu0 0
    %112 = vmatpush.bf16.msra.mxu0 %v99
    %113 = vmatpush.bf16.msra.mxu0 %v98
    %114 = vmatpush.bf16.msra.mxu0 %v97
    %115 = vmatpush.bf16.msra.mxu0 %v96
    %116 = vmatmul.bf16.gmra.mxu0 %v106
    %v117 = vpop.f32.mrf.mxu0
    %v118 = vadd.f32 %v78, %v117
    %v119 = vpop.f32.mrf.mxu0
    %120 = vdwg.mxu0
    %v121 = vmax.f32 %v118, 0.0
    %v122 = vpack.c.bf16 %v121, %v121
    %v123 = vld [vmem:[%s5] sm:$0xff]
    %v124 = vld [vmem:[%s5 + $0x8] sm:$0xff]
    %v125 = vld [vmem:[%s5 + $0x10] sm:$0xff]
    %v126 = vld [vmem:[%s5 + $0x18] sm:$0xf]
    %v127 = vld [vmem:[%s5 + $0x1c] sm:$0xff]
    %v128 = vld [vmem:[%s5 + $0x24] sm:$0xff]
    %v129 = vld [vmem:[%s5 + $0x2c] sm:$0xff]
    %v130 = vld [vmem:[%s5 + $0x34] sm:$0xf]
    %v131 = vld [vmem:[%s5 + $0x38] sm:$0xff]
    %v132 = vld [vmem:[%s5 + $0x40] sm:$0xff]
    %v133 = vld [vmem:[%s5 + $0x48] sm:$0xff]
    %v134 = vld [vmem:[%s5 + $0x50] sm:$0xf]
    %v135 = vld [vmem:[%s5 + $0x54] sm:$0xff]
    %v136 = vld [vmem:[%s5 + $0x5c] sm:$0xff]
    %v137 = vld [vmem:[%s5 + $0x64] sm:$0xff]
    %v138 = vld [vmem:[%s5 + $0x6c] sm:$0xf]
    %v139 = vld [vmem:[%s5 + $0x70] sm:$0xff]
    %v140 = vld [vmem:[%s5 + $0x78] sm:$0xff]
    %v141 = vld [vmem:[%s5 + $0x80] sm:$0xff]
    %v142 = vld [vmem:[%s5 + $0x88] sm:$0xf]
    %v143 = vld [vmem:[%s5 + $0x8c] sm:$0xff]
    %v144 = vld [vmem:[%s5 + $0x94] sm:$0xff]
    %v145 = vld [vmem:[%s5 + $0x9c] sm:$0xff]
    %v146 = vld [vmem:[%s5 + $0xa4] sm:$0xf]
    %v147 = vld [vmem:[%s5 + $0xa8] sm:$0xff]
    %v148 = vld [vmem:[%s5 + $0xb0] sm:$0xff]
    %v149 = vld [vmem:[%s5 + $0xb8] sm:$0xff]
    %v150 = vld [vmem:[%s5 + $0xc0] sm:$0xf]
    %v151 = vld [vmem:[%s5 + $0xc4] sm:$0xff]
    %v152 = vld [vmem:[%s5 + $0xcc] sm:$0xff]
    %v153 = vld [vmem:[%s5 + $0xd4] sm:$0xff]
    %v154 = vld [vmem:[%s5 + $0xdc] sm:$0xf]
    %v155 = vld [vmem:[%s5 + $0xe0] sm:$0xff]
    %v156 = vld [vmem:[%s5 + $0xe8] sm:$0xff]
    %v157 = vld [vmem:[%s5 + $0xf0] sm:$0xff]
    %v158 = vld [vmem:[%s5 + $0xf8] sm:$0xf]
    %v159 = vld [vmem:[%s5 + $0xfc] sm:$0xff]
    %v160 = vld [vmem:[%s5 + $0x104] sm:$0xff]
    %v161 = vld [vmem:[%s5 + $0x10c] sm:$0xff]
    %v162 = vld [vmem:[%s5 + $0x114] sm:$0xf]
    %v163 = vld [vmem:[%s5 + $0x118] sm:$0xff]
    %v164 = vld [vmem:[%s5 + $0x120] sm:$0xff]
    %v165 = vld [vmem:[%s5 + $0x128] sm:$0xff]
    %v166 = vld [vmem:[%s5 + $0x130] sm:$0xf]
    %v167 = vld [vmem:[%s5 + $0x134] sm:$0xff]
    %v168 = vld [vmem:[%s5 + $0x13c] sm:$0xff]
    %v169 = vld [vmem:[%s5 + $0x144] sm:$0xff]
    %v170 = vld [vmem:[%s5 + $0x14c] sm:$0xf]
    %v171 = vld [vmem:[%s5 + $0x150] sm:$0xff]
    %v172 = vld [vmem:[%s5 + $0x158] sm:$0xff]
    %v173 = vld [vmem:[%s5 + $0x160] sm:$0xff]
    %v174 = vld [vmem:[%s5 + $0x168] sm:$0xf]
    %v175 = vld [vmem:[%s5 + $0x16c] sm:$0xff]
    %v176 = vld [vmem:[%s5 + $0x174] sm:$0xff]
    %v177 = vld [vmem:[%s5 + $0x17c] sm:$0xff]
    %v178 = vld [vmem:[%s5 + $0x184] sm:$0xf]
    %v179 = vld [vmem:[%s5 + $0x188] sm:$0xff]
    %v180 = vld [vmem:[%s5 + $0x190] sm:$0xff]
    %v181 = vld [vmem:[%s5 + $0x198] sm:$0xff]
    %v182 = vld [vmem:[%s5 + $0x1a0] sm:$0xf]
    %v183 = vld [vmem:[%s5 + $0x1a4] sm:$0xff]
    %v184 = vld [vmem:[%s5 + $0x1ac] sm:$0xff]
    %v185 = vld [vmem:[%s5 + $0x1b4] sm:$0xff]
    %v186 = vld [vmem:[%s5 + $0x1bc] sm:$0xf]
    %v187 = vld [vmem:[%s6] sm:$0x7f]
    %v189 = vperm.slane %v187, 0
    %v190 = vperm.slane %v187, 1
    %v191 = vperm.slane %v187, 2
    %v192 = vperm.slane %v187, 3
    %v193 = vperm.slane %v187, 4
    %v194 = vperm.slane %v187, 5
    %v195 = vperm.slane %v187, 6
    %v267 = vunpack.c.l.b16 %v123
    %v268 = vunpack.c.h.b16 %v123
    %v269 = vunpack.c.l.b16 %v124
    %v270 = vunpack.c.h.b16 %v124
    %v271 = vunpack.c.l.b16 %v125
    %v272 = vunpack.c.h.b16 %v125
    %v273 = vunpack.c.l.b16 %v126
    %v274 = vunpack.c.l.b16 %v127
    %v275 = vunpack.c.h.b16 %v127
    %v276 = vunpack.c.l.b16 %v128
    %v277 = vunpack.c.h.b16 %v128
    %v278 = vunpack.c.l.b16 %v129
    %v279 = vunpack.c.h.b16 %v129
    %v280 = vunpack.c.l.b16 %v130
    %v281 = vunpack.c.l.b16 %v131
    %v282 = vunpack.c.h.b16 %v131
    %v283 = vunpack.c.l.b16 %v132
    %v284 = vunpack.c.h.b16 %v132
    %v285 = vunpack.c.l.b16 %v133
    %v286 = vunpack.c.h.b16 %v133
    %v287 = vunpack.c.l.b16 %v134
    %v288 = vunpack.c.l.b16 %v135
    %v289 = vunpack.c.h.b16 %v135
    %v290 = vunpack.c.l.b16 %v136
    %v291 = vunpack.c.h.b16 %v136
    %v292 = vunpack.c.l.b16 %v137
    %v293 = vunpack.c.h.b16 %v137
    %v294 = vunpack.c.l.b16 %v138
    %v295 = vunpack.c.l.b16 %v139
    %v296 = vunpack.c.h.b16 %v139
    %v297 = vunpack.c.l.b16 %v140
    %v298 = vunpack.c.h.b16 %v140
    %v299 = vunpack.c.l.b16 %v141
    %v300 = vunpack.c.h.b16 %v141
    %v301 = vunpack.c.l.b16 %v142
    %v302 = vunpack.c.l.b16 %v143
    %v303 = vunpack.c.h.b16 %v143
    %v304 = vunpack.c.l.b16 %v144
    %v305 = vunpack.c.h.b16 %v144
    %v306 = vunpack.c.l.b16 %v145
    %v307 = vunpack.c.h.b16 %v145
    %v308 = vunpack.c.l.b16 %v146
    %v309 = vunpack.c.l.b16 %v147
    %v310 = vunpack.c.h.b16 %v147
    %v311 = vunpack.c.l.b16 %v148
    %v312 = vunpack.c.h.b16 %v148
    %v313 = vunpack.c.l.b16 %v149
    %v314 = vunpack.c.h.b16 %v149
    %v315 = vunpack.c.l.b16 %v150
    %v316 = vunpack.c.l.b16 %v151
    %v317 = vunpack.c.h.b16 %v151
    %v318 = vunpack.c.l.b16 %v152
    %v319 = vunpack.c.h.b16 %v152
    %v320 = vunpack.c.l.b16 %v153
    %v321 = vunpack.c.h.b16 %v153
    %v322 = vunpack.c.l.b16 %v154
    %v323 = vunpack.c.l.b16 %v155
    %v324 = vunpack.c.h.b16 %v155
    %v325 = vunpack.c.l.b16 %v156
    %v326 = vunpack.c.h.b16 %v156
    %v327 = vunpack.c.l.b16 %v157
    %v328 = vunpack.c.h.b16 %v157
    %v329 = vunpack.c.l.b16 %v158
    %v330 = vunpack.c.l.b16 %v159
    %v331 = vunpack.c.h.b16 %v159
    %v332 = vunpack.c.l.b16 %v160
    %v333 = vunpack.c.h.b16 %v160
    %v334 = vunpack.c.l.b16 %v161
    %v335 = vunpack.c.h.b16 %v161
    %v336 = vunpack.c.l.b16 %v162
    %v337 = vunpack.c.l.b16 %v163
    %v338 = vunpack.c.h.b16 %v163
    %v339 = vunpack.c.l.b16 %v164
    %v340 = vunpack.c.h.b16 %v164
    %v341 = vunpack.c.l.b16 %v165
    %v342 = vunpack.c.h.b16 %v165
    %v343 = vunpack.c.l.b16 %v166
    %v344 = vunpack.c.l.b16 %v167
    %v345 = vunpack.c.h.b16 %v167
    %v346 = vunpack.c.l.b16 %v168
    %v347 = vunpack.c.h.b16 %v168
    %v348 = vunpack.c.l.b16 %v169
    %v349 = vunpack.c.h.b16 %v169
    %v350 = vunpack.c.l.b16 %v170
    %v351 = vunpack.c.l.b16 %v171
    %v352 = vunpack.c.h.b16 %v171
    %v353 = vunpack.c.l.b16 %v172
    %v354 = vunpack.c.h.b16 %v172
    %v355 = vunpack.c.l.b16 %v173
    %v356 = vunpack.c.h.b16 %v173
    %v357 = vunpack.c.l.b16 %v174
    %v358 = vunpack.c.l.b16 %v175
    %v359 = vunpack.c.h.b16 %v175
    %v360 = vunpack.c.l.b16 %v176
    %v361 = vunpack.c.h.b16 %v176
    %v362 = vunpack.c.l.b16 %v177
    %v363 = vunpack.c.h.b16 %v177
    %v364 = vunpack.c.l.b16 %v178
    %v365 = vunpack.c.l.b16 %v179
    %v366 = vunpack.c.h.b16 %v179
    %v367 = vunpack.c.l.b16 %v180
    %v368 = vunpack.c.h.b16 %v180
    %v369 = vunpack.c.l.b16 %v181
    %v370 = vunpack.c.h.b16 %v181
    %v371 = vunpack.c.l.b16 %v182
    %v372 = vunpack.c.l.b16 %v183
    %v373 = vunpack.c.h.b16 %v183
    %v374 = vunpack.c.l.b16 %v184
    %v375 = vunpack.c.h.b16 %v184
    %v376 = vunpack.c.l.b16 %v185
    %v377 = vunpack.c.h.b16 %v185
    %v378 = vunpack.c.l.b16 %v186
    %v379 = vpack.c.b16 %v274, %v267
    %v380 = vpack.c.b16 %v275, %v268
    %v381 = vpack.c.b16 %v276, %v269
    %v382 = vpack.c.b16 %v277, %v270
    %v383 = vpack.c.b16 %v278, %v271
    %v384 = vpack.c.b16 %v279, %v272
    %v385 = vpack.c.b16 %v280, %v273
    %v386 = vpack.c.b16 %v288, %v281
    %v387 = vpack.c.b16 %v289, %v282
    %v388 = vpack.c.b16 %v290, %v283
    %v389 = vpack.c.b16 %v291, %v284
    %v390 = vpack.c.b16 %v292, %v285
    %v391 = vpack.c.b16 %v293, %v286
    %v392 = vpack.c.b16 %v294, %v287
    %v393 = vpack.c.b16 %v302, %v295
    %v394 = vpack.c.b16 %v303, %v296
    %v395 = vpack.c.b16 %v304, %v297
    %v396 = vpack.c.b16 %v305, %v298
    %v397 = vpack.c.b16 %v306, %v299
    %v398 = vpack.c.b16 %v307, %v300
    %v399 = vpack.c.b16 %v308, %v301
    %v400 = vpack.c.b16 %v316, %v309
    %v401 = vpack.c.b16 %v317, %v310
    %v402 = vpack.c.b16 %v318, %v311
    %v403 = vpack.c.b16 %v319, %v312
    %v404 = vpack.c.b16 %v320, %v313
    %v405 = vpack.c.b16 %v321, %v314
    %v406 = vpack.c.b16 %v322, %v315
    %v407 = vpack.c.b16 %v330, %v323
    %v408 = vpack.c.b16 %v331, %v324
    %v409 = vpack.c.b16 %v332, %v325
    %v410 = vpack.c.b16 %v333, %v326
    %v411 = vpack.c.b16 %v334, %v327
    %v412 = vpack.c.b16 %v335, %v328
    %v413 = vpack.c.b16 %v336, %v329
    %v414 = vpack.c.b16 %v344, %v337
    %v415 = vpack.c.b16 %v345, %v338
    %v416 = vpack.c.b16 %v346, %v339
    %v417 = vpack.c.b16 %v347, %v340
    %v418 = vpack.c.b16 %v348, %v341
    %v419 = vpack.c.b16 %v349, %v342
    %v420 = vpack.c.b16 %v350, %v343
    %v421 = vpack.c.b16 %v358, %v351
    %v422 = vpack.c.b16 %v359, %v352
    %v423 = vpack.c.b16 %v360, %v353
    %v424 = vpack.c.b16 %v361, %v354
    %v425 = vpack.c.b16 %v362, %v355
    %v426 = vpack.c.b16 %v363, %v356
    %v427 = vpack.c.b16 %v364, %v357
    %v428 = vpack.c.b16 %v372, %v365
    %v429 = vpack.c.b16 %v373, %v366
    %v430 = vpack.c.b16 %v374, %v367
    %v431 = vpack.c.b16 %v375, %v368
    %v432 = vpack.c.b16 %v376, %v369
    %v433 = vpack.c.b16 %v377, %v370
    %v434 = vpack.c.b16 %v378, %v371
    %491 = vmatpush.bf16.msra.mxu0 %v428
    %492 = vmatpush.bf16.msra.mxu0 %v421
    %493 = vmatpush.bf16.msra.mxu0 %v414
    %494 = vmatpush.bf16.msra.mxu0 %v407
    %495 = vmatpush.bf16.msra.mxu0 %v400
    %496 = vmatpush.bf16.msra.mxu0 %v393
    %497 = vmatpush.bf16.msra.mxu0 %v386
    %498 = vmatpush.bf16.msra.mxu0 %v379
    %499 = vmatmul.bf16.gmra.mxu0 %v122
    %v500 = vpop.f32.mrf.mxu0
    %v501 = vadd.f32 %v189, %v500
    %v502 = vpop.f32.mrf.mxu0
    %503 = vdwg.mxu0
    %504 = vmatpush.bf16.msra.mxu0 %v429
    %505 = vmatpush.bf16.msra.mxu0 %v422
    %506 = vmatpush.bf16.msra.mxu0 %v415
    %507 = vmatpush.bf16.msra.mxu0 %v408
    %508 = vmatpush.bf16.msra.mxu0 %v401
    %509 = vmatpush.bf16.msra.mxu0 %v394
    %510 = vmatpush.bf16.msra.mxu0 %v387
    %511 = vmatpush.bf16.msra.mxu0 %v380
    %512 = vmatmul.bf16.gmra.mxu0 %v122
    %v513 = vpop.f32.mrf.mxu0
    %v514 = vadd.f32 %v190, %v513
    %v515 = vpop.f32.mrf.mxu0
    %516 = vdwg.mxu0
    %517 = vmatpush.bf16.msra.mxu0 %v430
    %518 = vmatpush.bf16.msra.mxu0 %v423
    %519 = vmatpush.bf16.msra.mxu0 %v416
    %520 = vmatpush.bf16.msra.mxu0 %v409
    %521 = vmatpush.bf16.msra.mxu0 %v402
    %522 = vmatpush.bf16.msra.mxu0 %v395
    %523 = vmatpush.bf16.msra.mxu0 %v388
    %524 = vmatpush.bf16.msra.mxu0 %v381
    %525 = vmatmul.bf16.gmra.mxu0 %v122
    %v526 = vpop.f32.mrf.mxu0
    %v527 = vadd.f32 %v191, %v526
    %v528 = vpop.f32.mrf.mxu0
    %529 = vdwg.mxu0
    %530 = vmatpush.bf16.msra.mxu0 %v431
    %531 = vmatpush.bf16.msra.mxu0 %v424
    %532 = vmatpush.bf16.msra.mxu0 %v417
    %533 = vmatpush.bf16.msra.mxu0 %v410
    %534 = vmatpush.bf16.msra.mxu0 %v403
    %535 = vmatpush.bf16.msra.mxu0 %v396
    %536 = vmatpush.bf16.msra.mxu0 %v389
    %537 = vmatpush.bf16.msra.mxu0 %v382
    %538 = vmatmul.bf16.gmra.mxu0 %v122
    %v539 = vpop.f32.mrf.mxu0
    %v540 = vadd.f32 %v192, %v539
    %v541 = vpop.f32.mrf.mxu0
    %542 = vdwg.mxu0
    %543 = vmatpush.bf16.msra.mxu0 %v432
    %544 = vmatpush.bf16.msra.mxu0 %v425
    %545 = vmatpush.bf16.msra.mxu0 %v418
    %546 = vmatpush.bf16.msra.mxu0 %v411
    %547 = vmatpush.bf16.msra.mxu0 %v404
    %548 = vmatpush.bf16.msra.mxu0 %v397
    %549 = vmatpush.bf16.msra.mxu0 %v390
    %550 = vmatpush.bf16.msra.mxu0 %v383
    %551 = vmatmul.bf16.gmra.mxu0 %v122
    %v552 = vpop.f32.mrf.mxu0
    %v553 = vadd.f32 %v193, %v552
    %v554 = vpop.f32.mrf.mxu0
    %555 = vdwg.mxu0
    %556 = vmatpush.bf16.msra.mxu0 %v433
    %557 = vmatpush.bf16.msra.mxu0 %v426
    %558 = vmatpush.bf16.msra.mxu0 %v419
    %559 = vmatpush.bf16.msra.mxu0 %v412
    %560 = vmatpush.bf16.msra.mxu0 %v405
    %561 = vmatpush.bf16.msra.mxu0 %v398
    %562 = vmatpush.bf16.msra.mxu0 %v391
    %563 = vmatpush.bf16.msra.mxu0 %v384
    %564 = vmatmul.bf16.gmra.mxu0 %v122
    %v565 = vpop.f32.mrf.mxu0
    %v566 = vadd.f32 %v194, %v565
    %v567 = vpop.f32.mrf.mxu0
    %568 = vdwg.mxu0
    %569 = vmatpush.bf16.msra.mxu0 %v434
    %570 = vmatpush.bf16.msra.mxu0 %v427
    %571 = vmatpush.bf16.msra.mxu0 %v420
    %572 = vmatpush.bf16.msra.mxu0 %v413
    %573 = vmatpush.bf16.msra.mxu0 %v406
    %574 = vmatpush.bf16.msra.mxu0 %v399
    %575 = vmatpush.bf16.msra.mxu0 %v392
    %576 = vmatpush.bf16.msra.mxu0 %v385
    %577 = vmatmul.bf16.gmra.mxu0 %v122
    %v578 = vpop.f32.mrf.mxu0
    %v579 = vadd.f32 %v195, %v578
    %v580 = vpop.f32.mrf.mxu0
    %581 = vdwg.mxu0
    %v582 = vxor.u32 %v501, 2147483648
    %v583 = vxor.u32 %v514, 2147483648
    %v584 = vxor.u32 %v527, 2147483648
    %v585 = vxor.u32 %v540, 2147483648
    %v586 = vxor.u32 %v553, 2147483648
    %v587 = vxor.u32 %v566, 2147483648
    %v588 = vxor.u32 %v579, 2147483648
    %v589 = vmul.f32 %v582, 1.442695
    %v590 = vpow.pop %v589
    %v591 = vmul.f32 %v583, 1.442695
    %v592 = vpow.pop %v591
    %v593 = vmul.f32 %v584, 1.442695
    %v594 = vpow.pop %v593
    %v595 = vmul.f32 %v585, 1.442695
    %v596 = vpow.pop %v595
    %v597 = vmul.f32 %v586, 1.442695
    %v598 = vpow.pop %v597
    %v599 = vmul.f32 %v587, 1.442695
    %v600 = vpow.pop %v599
    %v601 = vmul.f32 %v588, 1.442695
    %v602 = vpow.pop %v601
    %v603 = vadd.f32 %v590, 1.0
    %v604 = vadd.f32 %v592, 1.0
    %v605 = vadd.f32 %v594, 1.0
    %v606 = vadd.f32 %v596, 1.0
    %v607 = vadd.f32 %v598, 1.0
    %v608 = vadd.f32 %v600, 1.0
    %v609 = vadd.f32 %v602, 1.0
    %v610 = vrcp.pop %v603
    %v611 = vmul.f32 %v603, %v610
    %v612 = vsub.f32 1.0, %v611
    %v613 = vmul.f32 %v610, %v612
    %v614 = vadd.f32 %v610, %v613
    %vm615 = vweird.f32 %v603
    %vm616 = vweird.f32 %v610
    %vm617 = vmor %vm615, %vm616
    %v618 = vsel %vm617, %v610, %v614
    %v619 = vand.u32 2147483647, %v603
    %vm620 = vcmp.eq.f32.partialorder %v619, 8.507059e+37
    %v621 = vand.u32 %v603, 2147483648
    %v622 = vor.u32 1.1754944e-38, %v621
    %v623 = vsel %vm620, %v622, %v618
    %v624 = vmul.f32 1.0, %v623
    %v625 = vrcp.pop %v604
    %v626 = vmul.f32 %v604, %v625
    %v627 = vsub.f32 1.0, %v626
    %v628 = vmul.f32 %v625, %v627
    %v629 = vadd.f32 %v625, %v628
    %vm630 = vweird.f32 %v604
    %vm631 = vweird.f32 %v625
    %vm632 = vmor %vm630, %vm631
    %v633 = vsel %vm632, %v625, %v629
    %v634 = vand.u32 2147483647, %v604
    %vm635 = vcmp.eq.f32.partialorder %v634, 8.507059e+37
    %v636 = vand.u32 %v604, 2147483648
    %v637 = vor.u32 1.1754944e-38, %v636
    %v638 = vsel %vm635, %v637, %v633
    %v639 = vmul.f32 1.0, %v638
    %v640 = vrcp.pop %v605
    %v641 = vmul.f32 %v605, %v640
    %v642 = vsub.f32 1.0, %v641
    %v643 = vmul.f32 %v640, %v642
    %v644 = vadd.f32 %v640, %v643
    %vm645 = vweird.f32 %v605
    %vm646 = vweird.f32 %v640
    %vm647 = vmor %vm645, %vm646
    %v648 = vsel %vm647, %v640, %v644
    %v649 = vand.u32 2147483647, %v605
    %vm650 = vcmp.eq.f32.partialorder %v649, 8.507059e+37
    %v651 = vand.u32 %v605, 2147483648
    %v652 = vor.u32 1.1754944e-38, %v651
    %v653 = vsel %vm650, %v652, %v648
    %v654 = vmul.f32 1.0, %v653
    %v655 = vrcp.pop %v606
    %v656 = vmul.f32 %v606, %v655
    %v657 = vsub.f32 1.0, %v656
    %v658 = vmul.f32 %v655, %v657
    %v659 = vadd.f32 %v655, %v658
    %vm660 = vweird.f32 %v606
    %vm661 = vweird.f32 %v655
    %vm662 = vmor %vm660, %vm661
    %v663 = vsel %vm662, %v655, %v659
    %v664 = vand.u32 2147483647, %v606
    %vm665 = vcmp.eq.f32.partialorder %v664, 8.507059e+37
    %v666 = vand.u32 %v606, 2147483648
    %v667 = vor.u32 1.1754944e-38, %v666
    %v668 = vsel %vm665, %v667, %v663
    %v669 = vmul.f32 1.0, %v668
    %v670 = vrcp.pop %v607
    %v671 = vmul.f32 %v607, %v670
    %v672 = vsub.f32 1.0, %v671
    %v673 = vmul.f32 %v670, %v672
    %v674 = vadd.f32 %v670, %v673
    %vm675 = vweird.f32 %v607
    %vm676 = vweird.f32 %v670
    %vm677 = vmor %vm675, %vm676
    %v678 = vsel %vm677, %v670, %v674
    %v679 = vand.u32 2147483647, %v607
    %vm680 = vcmp.eq.f32.partialorder %v679, 8.507059e+37
    %v681 = vand.u32 %v607, 2147483648
    %v682 = vor.u32 1.1754944e-38, %v681
    %v683 = vsel %vm680, %v682, %v678
    %v684 = vmul.f32 1.0, %v683
    %v685 = vrcp.pop %v608
    %v686 = vmul.f32 %v608, %v685
    %v687 = vsub.f32 1.0, %v686
    %v688 = vmul.f32 %v685, %v687
    %v689 = vadd.f32 %v685, %v688
    %vm690 = vweird.f32 %v608
    %vm691 = vweird.f32 %v685
    %vm692 = vmor %vm690, %vm691
    %v693 = vsel %vm692, %v685, %v689
    %v694 = vand.u32 2147483647, %v608
    %vm695 = vcmp.eq.f32.partialorder %v694, 8.507059e+37
    %v696 = vand.u32 %v608, 2147483648
    %v697 = vor.u32 1.1754944e-38, %v696
    %v698 = vsel %vm695, %v697, %v693
    %v699 = vmul.f32 1.0, %v698
    %v700 = vrcp.pop %v609
    %v701 = vmul.f32 %v609, %v700
    %v702 = vsub.f32 1.0, %v701
    %v703 = vmul.f32 %v700, %v702
    %v704 = vadd.f32 %v700, %v703
    %vm705 = vweird.f32 %v609
    %vm706 = vweird.f32 %v700
    %vm707 = vmor %vm705, %vm706
    %v708 = vsel %vm707, %v700, %v704
    %v709 = vand.u32 2147483647, %v609
    %vm710 = vcmp.eq.f32.partialorder %v709, 8.507059e+37
    %v711 = vand.u32 %v609, 2147483648
    %v712 = vor.u32 1.1754944e-38, %v711
    %v713 = vsel %vm710, %v712, %v708
    %v714 = vmul.f32 1.0, %v713
    %v715 = vpack.c.bf16 %v639, %v624
    %v716 = vpack.c.bf16 %v669, %v654
    %v717 = vpack.c.bf16 %v699, %v684
    %v718 = vpack.c.bf16 %v714, %v714
    %719 = vst [vmem:[#allocation2] sm:$0xff] %v715
    %720 = vst [vmem:[#allocation2 + $0x8] sm:$0xff] %v716
    %721 = vst [vmem:[#allocation2 + $0x10] sm:$0xff] %v717
    %vm722 = vcmask 125952
    %723 = vst.msk [vmem:[#allocation2 + $0x18] sm:$0xf] %vm722, %v718
    // Predicated region
    $region30: #{tpu_custom_call.1} parent=1 // pred_check
      _
    $region31: #{tpu_custom_call.1} parent=1 // pred_check_branch
      %725 = sbr.rel (0) target = $region33
    $region32: #{tpu_custom_call.1} parent=1 // pred_region
      %727 = vsyncadd [#allocation3], 0
      %s729 = sshll.u32 [#allocation2], 4
      %s730 = int_to_ptr.vmem [resolvable:$true] %s729
      %s731 = sshll.u32 %s7, 4
      %s732 = int_to_ptr.hbm [resolvable:$true] %s731
      %734 = dma.vmem_to_hbm [thread:$0]  %s730, 448, %s732, [#allocation3]
    $region33: #{tpu_custom_call.1} parent=1 // pred_fallthru
      _
    // Predicated region
    $region34: #{tpu_custom_call.1} parent=1 // pred_check
      _
    $region35: #{tpu_custom_call.1} parent=1 // pred_check_branch
      %736 = sbr.rel (0) target = $region37
    $region36: #{tpu_custom_call.1} parent=1 // pred_region
      %738 = dma.done [#allocation3], 448
    $region37: #{tpu_custom_call.1} parent=1 // pred_fallthru
      _
    %739 = vsyncpa [#allocation3], 1

</llo_original>
